<compile_context>
chip_gen: v6e
topology: v6e:2x2x1
jax: 0.10.0
libtpu: 0.0.40
codegen_flags: <defaults>
</compile_context>

<pallas_src>
import jax
import jax.numpy as jnp
from jax.experimental import pallas as pl
from jax.experimental.pallas import tpu as pltpu


def lstm_seq_kernel(x_ref, wih_ref, whh_ref, b_ref, h_out_ref):
    """Runs the full LSTM recurrence over the sequence in one kernel call.

    x_ref    : (T, Bp, E)  bf16, time-major embedded inputs (batch padded to Bp)
    wih_ref  : (E, 4H)     bf16, fused input->gate weights, gate order [i|f|o|g]
    whh_ref  : (H, 4H)     bf16, fused hidden->gate weights
    b_ref    : (1, 4H)     f32,  combined bias (b_ih + b_hh)
    h_out_ref: (Bp, H)     f32,  final hidden state h_T
    """
    T, Bp, _ = x_ref.shape
    H = whh_ref.shape[0]

    # Hoist weight / bias loads out of the time loop.
    w_ih = wih_ref[...]
    w_hh = whh_ref[...]
    b = b_ref[...]

    def step(t, carry):
        h, c = carry                                       # (Bp, H) f32 each
        x_t = x_ref[t]                                     # (Bp, E) bf16
        # One fused (Bp, 4H) gate slab: 2 MXU matmuls + 1 bias add.
        gates = (jnp.dot(x_t, w_ih, preferred_element_type=jnp.float32)
                 + jnp.dot(h.astype(jnp.bfloat16), w_hh,
                           preferred_element_type=jnp.float32)
                 + b)                                      # (Bp, 4H) f32
        sig = jax.nn.sigmoid(gates[:, :3 * H])             # i, f, o in one go
        g_g = jnp.tanh(gates[:, 3 * H:])                   # g
        i_g = sig[:, :H]
        f_g = sig[:, H:2 * H]
        o_g = sig[:, 2 * H:]
        c_new = f_g * c + i_g * g_g
        h_new = o_g * jnp.tanh(c_new)
        return h_new, c_new

    h0 = jnp.zeros((Bp, H), jnp.float32)
    c0 = jnp.zeros((Bp, H), jnp.float32)
    h_fin, _ = jax.lax.fori_loop(0, T, step, (h0, c0), unroll=True)
    h_out_ref[...] = h_fin


def lstm_classifier_forward(tokens, params):
    """Forward pass matching LSTMClassifier.forward (num_layers=1)."""
    B, T = tokens.shape
    emb_table = params["embedding"]          # (V, E)
    w_ih = params["w_ih"]                    # (E, 4H), gate order [i|f|o|g]
    w_hh = params["w_hh"]                    # (H, 4H)
    bias = params["bias"]                    # (1, 4H) = b_ih + b_hh
    w_fc = params["w_fc"]                    # (H, O)
    b_fc = params["b_fc"]                    # (1, O)

    H = w_hh.shape[0]
    O = w_fc.shape[1]

    if T == 0:
        return jnp.zeros((B, O), jnp.float32)

    # Embedding gather (glue), time-major layout, batch padded to a sublane
    # multiple so all (Bp, *) tiles inside the kernel fill sublanes.
    Bp = max(8, -(-B // 8) * 8)
    x = emb_table[tokens]                              # (B, T, E)
    x = jnp.transpose(x, (1, 0, 2))                    # (T, B, E)
    if Bp != B:
        x = jnp.pad(x, ((0, 0), (0, Bp - B), (0, 0)))
    x = x.astype(jnp.bfloat16)

    h_fin = pl.pallas_call(
        lstm_seq_kernel,
        out_shape=jax.ShapeDtypeStruct((Bp, H), jnp.float32),
        in_specs=[
            pl.BlockSpec(memory_space=pltpu.MemorySpace.VMEM),   # x (T,Bp,E)
            pl.BlockSpec(memory_space=pltpu.MemorySpace.VMEM),   # w_ih (E,4H)
            pl.BlockSpec(memory_space=pltpu.MemorySpace.VMEM),   # w_hh (H,4H)
            pl.BlockSpec(memory_space=pltpu.MemorySpace.VMEM),   # bias (1,4H)
        ],
        out_specs=pl.BlockSpec(memory_space=pltpu.MemorySpace.VMEM),
    )(x,
      w_ih.astype(jnp.bfloat16),
      w_hh.astype(jnp.bfloat16),
      bias.astype(jnp.float32))

    # Final (B, H) @ (H, O) projection once, in plain JAX (O=4 would force a
    # lane-sparse masked store inside the kernel; here it runs a single time).
    return h_fin[:B] @ w_fc + b_fc


def init_params(key, vocab_size, embedding_dim, hidden_dim, output_dim,
                padding_idx):
    k_emb, k_ih, k_hh, k_bih, k_bhh, k_fc, k_bfc = jax.random.split(key, 7)
    scale = 1.0 / jnp.sqrt(hidden_dim)

    emb = jax.random.normal(k_emb, (vocab_size, embedding_dim), jnp.float32)
    # padding_idx row is zeroed (as in nn.Embedding with padding_idx).
    emb = emb.at[padding_idx].set(0.0)

    # Fused LSTM weights, stored transposed for x @ W; gate order [i|f|o|g]
    # along the 4H axis (the role of each column block is defined by how the
    # kernel slices the gate slab, so semantics match nn.LSTM).
    w_ih = jax.random.uniform(k_ih, (embedding_dim, 4 * hidden_dim),
                              jnp.float32, -scale, scale)
    w_hh = jax.random.uniform(k_hh, (hidden_dim, 4 * hidden_dim),
                              jnp.float32, -scale, scale)
    b_ih = jax.random.uniform(k_bih, (1, 4 * hidden_dim),
                              jnp.float32, -scale, scale)
    b_hh = jax.random.uniform(k_bhh, (1, 4 * hidden_dim),
                              jnp.float32, -scale, scale)

    w_fc = jax.random.uniform(k_fc, (hidden_dim, output_dim),
                              jnp.float32, -scale, scale)
    b_fc = jax.random.uniform(k_bfc, (1, output_dim),
                              jnp.float32, -scale, scale)

    return {
        "embedding": emb,
        "w_ih": w_ih,
        "w_hh": w_hh,
        "bias": b_ih + b_hh,
        "w_fc": w_fc,
        "b_fc": b_fc,
    }


def reference_forward(tokens, params):
    """Pure-JAX reference (same bf16 matmul inputs, f32 accumulation)."""
    B, T = tokens.shape
    H = params["w_hh"].shape[0]
    w_ih = params["w_ih"].astype(jnp.bfloat16)
    w_hh = params["w_hh"].astype(jnp.bfloat16)
    b = params["bias"]
    x = params["embedding"][tokens].astype(jnp.bfloat16)   # (B, T, E)

    def step(carry, x_t):
        h, c = carry
        gates = (jnp.dot(x_t, w_ih, preferred_element_type=jnp.float32)
                 + jnp.dot(h.astype(jnp.bfloat16), w_hh,
                           preferred_element_type=jnp.float32)
                 + b)
        i = jax.nn.sigmoid(gates[:, :H])
        f = jax.nn.sigmoid(gates[:, H:2 * H])
        o = jax.nn.sigmoid(gates[:, 2 * H:3 * H])
        g = jnp.tanh(gates[:, 3 * H:])
        c = f * c + i * g
        h = o * jnp.tanh(c)
        return (h, c), None

    h0 = jnp.zeros((B, H), jnp.float32)
    c0 = jnp.zeros((B, H), jnp.float32)
    (h, _), _ = jax.lax.scan(step, (h0, c0), jnp.transpose(x, (1, 0, 2)))
    return h @ params["w_fc"] + params["b_fc"]


if __name__ == "__main__":
    vocab_size = 50
    embedding_dim = 16
    hidden_dim = 32
    output_dim = 4
    padding_idx = 0
    batch = 2
    seq_len = 8

    key = jax.random.PRNGKey(0)
    k_params, k_tokens = jax.random.split(key)

    params = init_params(k_params, vocab_size, embedding_dim, hidden_dim,
                         output_dim, padding_idx)
    tokens = jax.random.randint(k_tokens, (batch, seq_len), 0, vocab_size,
                                dtype=jnp.int32)

    logits = lstm_classifier_forward(tokens, params)
    logits = jax.block_until_ready(logits)

    ref = reference_forward(tokens, params)
    assert logits.shape == (batch, output_dim)
    assert jnp.allclose(logits, ref, atol=1e-2, rtol=1e-2), (
        f"mismatch: {logits} vs {ref}")

    print("KERNEL_OK")
</pallas_src>

<mosaic_0001>
module attributes {stable_mosaic.version = 11 : i64} {
  func.func @lstm_seq_kernel(%arg0: memref<8x8x16xbf16, #tpu.memory_space<vmem>>, %arg1: memref<16x128xbf16, #tpu.memory_space<vmem>>, %arg2: memref<32x128xbf16, #tpu.memory_space<vmem>>, %arg3: memref<1x128xf32, #tpu.memory_space<vmem>>, %arg4: memref<8x32xf32, #tpu.memory_space<vmem>>) attributes {dimension_semantics = [], scalar_prefetch = 0 : i64, scratch_operands = 0 : i64, tpu.core_type = #tpu.core_type<tc>} {
    %c0 = arith.constant 0 : index
    %c0_0 = arith.constant 0 : index
    %0 = vector.load %arg1[%c0, %c0_0] : memref<16x128xbf16, #tpu.memory_space<vmem>>, vector<16x128xbf16>
    %c0_1 = arith.constant 0 : index
    %c0_2 = arith.constant 0 : index
    %1 = vector.load %arg2[%c0_1, %c0_2] : memref<32x128xbf16, #tpu.memory_space<vmem>>, vector<32x128xbf16>
    %c0_3 = arith.constant 0 : index
    %c0_4 = arith.constant 0 : index
    %2 = vector.load %arg3[%c0_3, %c0_4] : memref<1x128xf32, #tpu.memory_space<vmem>>, vector<1x128xf32>
    %cst = arith.constant 0.000000e+00 : f32
    %3 = vector.broadcast %cst : f32 to vector<8x32xf32>
    %cst_5 = arith.constant 0.000000e+00 : f32
    %4 = vector.broadcast %cst_5 : f32 to vector<8x32xf32>
    %c0_i32 = arith.constant 0 : i32
    %5 = arith.index_cast %c0_i32 : i32 to index
    %c0_6 = arith.constant 0 : index
    %c0_7 = arith.constant 0 : index
    %6 = vector.load %arg0[%5, %c0_6, %c0_7] : memref<8x8x16xbf16, #tpu.memory_space<vmem>>, vector<1x8x16xbf16>
    %7 = vector.shape_cast %6 : vector<1x8x16xbf16> to vector<8x16xbf16>
    %cst_8 = arith.constant dense<0.000000e+00> : vector<8x128xf32>
    %8 = tpu.matmul %7, %0, %cst_8 {dimension_numbers = #tpu.dot_dimension_numbers<[1], [0], [0], [1], [0, 0, 1, 1], [], []>} : vector<8x16xbf16>, vector<16x128xbf16>, vector<8x128xf32> -> vector<8x128xf32>
    %9 = arith.truncf %3 : vector<8x32xf32> to vector<8x32xbf16>
    %cst_9 = arith.constant dense<0.000000e+00> : vector<8x128xf32>
    %10 = tpu.matmul %9, %1, %cst_9 {dimension_numbers = #tpu.dot_dimension_numbers<[1], [0], [0], [1], [0, 0, 1, 1], [], []>} : vector<8x32xbf16>, vector<32x128xbf16>, vector<8x128xf32> -> vector<8x128xf32>
    %11 = arith.addf %8, %10 : vector<8x128xf32>
    %12 = vector.broadcast %2 : vector<1x128xf32> to vector<8x128xf32>
    %13 = arith.addf %11, %12 : vector<8x128xf32>
    %14 = vector.extract_strided_slice %13 {offsets = [0, 0], sizes = [8, 96], strides = [1, 1]} : vector<8x128xf32> to vector<8x96xf32>
    %15 = arith.negf %14 : vector<8x96xf32>
    %16 = math.exp %15 : vector<8x96xf32>
    %cst_10 = arith.constant 1.000000e+00 : f32
    %17 = vector.broadcast %cst_10 : f32 to vector<8x96xf32>
    %18 = arith.addf %17, %16 : vector<8x96xf32>
    %19 = arith.divf %17, %18 : vector<8x96xf32>
    %20 = vector.extract_strided_slice %13 {offsets = [0, 96], sizes = [8, 32], strides = [1, 1]} : vector<8x128xf32> to vector<8x32xf32>
    %21 = math.tanh %20 : vector<8x32xf32>
    %22 = vector.extract_strided_slice %19 {offsets = [0, 0], sizes = [8, 32], strides = [1, 1]} : vector<8x96xf32> to vector<8x32xf32>
    %23 = vector.extract_strided_slice %19 {offsets = [0, 32], sizes = [8, 32], strides = [1, 1]} : vector<8x96xf32> to vector<8x32xf32>
    %24 = vector.extract_strided_slice %19 {offsets = [0, 64], sizes = [8, 32], strides = [1, 1]} : vector<8x96xf32> to vector<8x32xf32>
    %25 = arith.mulf %23, %4 : vector<8x32xf32>
    %26 = arith.mulf %22, %21 : vector<8x32xf32>
    %27 = arith.addf %25, %26 : vector<8x32xf32>
    %28 = math.tanh %27 : vector<8x32xf32>
    %29 = arith.mulf %24, %28 : vector<8x32xf32>
    %c1_i32 = arith.constant 1 : i32
    %30 = arith.index_cast %c1_i32 : i32 to index
    %c0_11 = arith.constant 0 : index
    %c0_12 = arith.constant 0 : index
    %31 = vector.load %arg0[%30, %c0_11, %c0_12] : memref<8x8x16xbf16, #tpu.memory_space<vmem>>, vector<1x8x16xbf16>
    %32 = vector.shape_cast %31 : vector<1x8x16xbf16> to vector<8x16xbf16>
    %cst_13 = arith.constant dense<0.000000e+00> : vector<8x128xf32>
    %33 = tpu.matmul %32, %0, %cst_13 {dimension_numbers = #tpu.dot_dimension_numbers<[1], [0], [0], [1], [0, 0, 1, 1], [], []>} : vector<8x16xbf16>, vector<16x128xbf16>, vector<8x128xf32> -> vector<8x128xf32>
    %34 = arith.truncf %29 : vector<8x32xf32> to vector<8x32xbf16>
    %cst_14 = arith.constant dense<0.000000e+00> : vector<8x128xf32>
    %35 = tpu.matmul %34, %1, %cst_14 {dimension_numbers = #tpu.dot_dimension_numbers<[1], [0], [0], [1], [0, 0, 1, 1], [], []>} : vector<8x32xbf16>, vector<32x128xbf16>, vector<8x128xf32> -> vector<8x128xf32>
    %36 = arith.addf %33, %35 : vector<8x128xf32>
    %37 = vector.broadcast %2 : vector<1x128xf32> to vector<8x128xf32>
    %38 = arith.addf %36, %37 : vector<8x128xf32>
    %39 = vector.extract_strided_slice %38 {offsets = [0, 0], sizes = [8, 96], strides = [1, 1]} : vector<8x128xf32> to vector<8x96xf32>
    %40 = arith.negf %39 : vector<8x96xf32>
    %41 = math.exp %40 : vector<8x96xf32>
    %cst_15 = arith.constant 1.000000e+00 : f32
    %42 = vector.broadcast %cst_15 : f32 to vector<8x96xf32>
    %43 = arith.addf %42, %41 : vector<8x96xf32>
    %44 = arith.divf %42, %43 : vector<8x96xf32>
    %45 = vector.extract_strided_slice %38 {offsets = [0, 96], sizes = [8, 32], strides = [1, 1]} : vector<8x128xf32> to vector<8x32xf32>
    %46 = math.tanh %45 : vector<8x32xf32>
    %47 = vector.extract_strided_slice %44 {offsets = [0, 0], sizes = [8, 32], strides = [1, 1]} : vector<8x96xf32> to vector<8x32xf32>
    %48 = vector.extract_strided_slice %44 {offsets = [0, 32], sizes = [8, 32], strides = [1, 1]} : vector<8x96xf32> to vector<8x32xf32>
    %49 = vector.extract_strided_slice %44 {offsets = [0, 64], sizes = [8, 32], strides = [1, 1]} : vector<8x96xf32> to vector<8x32xf32>
    %50 = arith.mulf %48, %27 : vector<8x32xf32>
    %51 = arith.mulf %47, %46 : vector<8x32xf32>
    %52 = arith.addf %50, %51 : vector<8x32xf32>
    %53 = math.tanh %52 : vector<8x32xf32>
    %54 = arith.mulf %49, %53 : vector<8x32xf32>
    %c2_i32 = arith.constant 2 : i32
    %55 = arith.index_cast %c2_i32 : i32 to index
    %c0_16 = arith.constant 0 : index
    %c0_17 = arith.constant 0 : index
    %56 = vector.load %arg0[%55, %c0_16, %c0_17] : memref<8x8x16xbf16, #tpu.memory_space<vmem>>, vector<1x8x16xbf16>
    %57 = vector.shape_cast %56 : vector<1x8x16xbf16> to vector<8x16xbf16>
    %cst_18 = arith.constant dense<0.000000e+00> : vector<8x128xf32>
    %58 = tpu.matmul %57, %0, %cst_18 {dimension_numbers = #tpu.dot_dimension_numbers<[1], [0], [0], [1], [0, 0, 1, 1], [], []>} : vector<8x16xbf16>, vector<16x128xbf16>, vector<8x128xf32> -> vector<8x128xf32>
    %59 = arith.truncf %54 : vector<8x32xf32> to vector<8x32xbf16>
    %cst_19 = arith.constant dense<0.000000e+00> : vector<8x128xf32>
    %60 = tpu.matmul %59, %1, %cst_19 {dimension_numbers = #tpu.dot_dimension_numbers<[1], [0], [0], [1], [0, 0, 1, 1], [], []>} : vector<8x32xbf16>, vector<32x128xbf16>, vector<8x128xf32> -> vector<8x128xf32>
    %61 = arith.addf %58, %60 : vector<8x128xf32>
    %62 = vector.broadcast %2 : vector<1x128xf32> to vector<8x128xf32>
    %63 = arith.addf %61, %62 : vector<8x128xf32>
    %64 = vector.extract_strided_slice %63 {offsets = [0, 0], sizes = [8, 96], strides = [1, 1]} : vector<8x128xf32> to vector<8x96xf32>
    %65 = arith.negf %64 : vector<8x96xf32>
    %66 = math.exp %65 : vector<8x96xf32>
    %cst_20 = arith.constant 1.000000e+00 : f32
    %67 = vector.broadcast %cst_20 : f32 to vector<8x96xf32>
    %68 = arith.addf %67, %66 : vector<8x96xf32>
    %69 = arith.divf %67, %68 : vector<8x96xf32>
    %70 = vector.extract_strided_slice %63 {offsets = [0, 96], sizes = [8, 32], strides = [1, 1]} : vector<8x128xf32> to vector<8x32xf32>
    %71 = math.tanh %70 : vector<8x32xf32>
    %72 = vector.extract_strided_slice %69 {offsets = [0, 0], sizes = [8, 32], strides = [1, 1]} : vector<8x96xf32> to vector<8x32xf32>
    %73 = vector.extract_strided_slice %69 {offsets = [0, 32], sizes = [8, 32], strides = [1, 1]} : vector<8x96xf32> to vector<8x32xf32>
    %74 = vector.extract_strided_slice %69 {offsets = [0, 64], sizes = [8, 32], strides = [1, 1]} : vector<8x96xf32> to vector<8x32xf32>
    %75 = arith.mulf %73, %52 : vector<8x32xf32>
    %76 = arith.mulf %72, %71 : vector<8x32xf32>
    %77 = arith.addf %75, %76 : vector<8x32xf32>
    %78 = math.tanh %77 : vector<8x32xf32>
    %79 = arith.mulf %74, %78 : vector<8x32xf32>
    %c3_i32 = arith.constant 3 : i32
    %80 = arith.index_cast %c3_i32 : i32 to index
    %c0_21 = arith.constant 0 : index
    %c0_22 = arith.constant 0 : index
    %81 = vector.load %arg0[%80, %c0_21, %c0_22] : memref<8x8x16xbf16, #tpu.memory_space<vmem>>, vector<1x8x16xbf16>
    %82 = vector.shape_cast %81 : vector<1x8x16xbf16> to vector<8x16xbf16>
    %cst_23 = arith.constant dense<0.000000e+00> : vector<8x128xf32>
    %83 = tpu.matmul %82, %0, %cst_23 {dimension_numbers = #tpu.dot_dimension_numbers<[1], [0], [0], [1], [0, 0, 1, 1], [], []>} : vector<8x16xbf16>, vector<16x128xbf16>, vector<8x128xf32> -> vector<8x128xf32>
    %84 = arith.truncf %79 : vector<8x32xf32> to vector<8x32xbf16>
    %cst_24 = arith.constant dense<0.000000e+00> : vector<8x128xf32>
    %85 = tpu.matmul %84, %1, %cst_24 {dimension_numbers = #tpu.dot_dimension_numbers<[1], [0], [0], [1], [0, 0, 1, 1], [], []>} : vector<8x32xbf16>, vector<32x128xbf16>, vector<8x128xf32> -> vector<8x128xf32>
    %86 = arith.addf %83, %85 : vector<8x128xf32>
    %87 = vector.broadcast %2 : vector<1x128xf32> to vector<8x128xf32>
    %88 = arith.addf %86, %87 : vector<8x128xf32>
    %89 = vector.extract_strided_slice %88 {offsets = [0, 0], sizes = [8, 96], strides = [1, 1]} : vector<8x128xf32> to vector<8x96xf32>
    %90 = arith.negf %89 : vector<8x96xf32>
    %91 = math.exp %90 : vector<8x96xf32>
    %cst_25 = arith.constant 1.000000e+00 : f32
    %92 = vector.broadcast %cst_25 : f32 to vector<8x96xf32>
    %93 = arith.addf %92, %91 : vector<8x96xf32>
    %94 = arith.divf %92, %93 : vector<8x96xf32>
    %95 = vector.extract_strided_slice %88 {offsets = [0, 96], sizes = [8, 32], strides = [1, 1]} : vector<8x128xf32> to vector<8x32xf32>
    %96 = math.tanh %95 : vector<8x32xf32>
    %97 = vector.extract_strided_slice %94 {offsets = [0, 0], sizes = [8, 32], strides = [1, 1]} : vector<8x96xf32> to vector<8x32xf32>
    %98 = vector.extract_strided_slice %94 {offsets = [0, 32], sizes = [8, 32], strides = [1, 1]} : vector<8x96xf32> to vector<8x32xf32>
    %99 = vector.extract_strided_slice %94 {offsets = [0, 64], sizes = [8, 32], strides = [1, 1]} : vector<8x96xf32> to vector<8x32xf32>
    %100 = arith.mulf %98, %77 : vector<8x32xf32>
    %101 = arith.mulf %97, %96 : vector<8x32xf32>
    %102 = arith.addf %100, %101 : vector<8x32xf32>
    %103 = math.tanh %102 : vector<8x32xf32>
    %104 = arith.mulf %99, %103 : vector<8x32xf32>
    %c4_i32 = arith.constant 4 : i32
    %105 = arith.index_cast %c4_i32 : i32 to index
    %c0_26 = arith.constant 0 : index
    %c0_27 = arith.constant 0 : index
    %106 = vector.load %arg0[%105, %c0_26, %c0_27] : memref<8x8x16xbf16, #tpu.memory_space<vmem>>, vector<1x8x16xbf16>
    %107 = vector.shape_cast %106 : vector<1x8x16xbf16> to vector<8x16xbf16>
    %cst_28 = arith.constant dense<0.000000e+00> : vector<8x128xf32>
    %108 = tpu.matmul %107, %0, %cst_28 {dimension_numbers = #tpu.dot_dimension_numbers<[1], [0], [0], [1], [0, 0, 1, 1], [], []>} : vector<8x16xbf16>, vector<16x128xbf16>, vector<8x128xf32> -> vector<8x128xf32>
    %109 = arith.truncf %104 : vector<8x32xf32> to vector<8x32xbf16>
    %cst_29 = arith.constant dense<0.000000e+00> : vector<8x128xf32>
    %110 = tpu.matmul %109, %1, %cst_29 {dimension_numbers = #tpu.dot_dimension_numbers<[1], [0], [0], [1], [0, 0, 1, 1], [], []>} : vector<8x32xbf16>, vector<32x128xbf16>, vector<8x128xf32> -> vector<8x128xf32>
    %111 = arith.addf %108, %110 : vector<8x128xf32>
    %112 = vector.broadcast %2 : vector<1x128xf32> to vector<8x128xf32>
    %113 = arith.addf %111, %112 : vector<8x128xf32>
    %114 = vector.extract_strided_slice %113 {offsets = [0, 0], sizes = [8, 96], strides = [1, 1]} : vector<8x128xf32> to vector<8x96xf32>
    %115 = arith.negf %114 : vector<8x96xf32>
    %116 = math.exp %115 : vector<8x96xf32>
    %cst_30 = arith.constant 1.000000e+00 : f32
    %117 = vector.broadcast %cst_30 : f32 to vector<8x96xf32>
    %118 = arith.addf %117, %116 : vector<8x96xf32>
    %119 = arith.divf %117, %118 : vector<8x96xf32>
    %120 = vector.extract_strided_slice %113 {offsets = [0, 96], sizes = [8, 32], strides = [1, 1]} : vector<8x128xf32> to vector<8x32xf32>
    %121 = math.tanh %120 : vector<8x32xf32>
    %122 = vector.extract_strided_slice %119 {offsets = [0, 0], sizes = [8, 32], strides = [1, 1]} : vector<8x96xf32> to vector<8x32xf32>
    %123 = vector.extract_strided_slice %119 {offsets = [0, 32], sizes = [8, 32], strides = [1, 1]} : vector<8x96xf32> to vector<8x32xf32>
    %124 = vector.extract_strided_slice %119 {offsets = [0, 64], sizes = [8, 32], strides = [1, 1]} : vector<8x96xf32> to vector<8x32xf32>
    %125 = arith.mulf %123, %102 : vector<8x32xf32>
    %126 = arith.mulf %122, %121 : vector<8x32xf32>
    %127 = arith.addf %125, %126 : vector<8x32xf32>
    %128 = math.tanh %127 : vector<8x32xf32>
    %129 = arith.mulf %124, %128 : vector<8x32xf32>
    %c5_i32 = arith.constant 5 : i32
    %130 = arith.index_cast %c5_i32 : i32 to index
    %c0_31 = arith.constant 0 : index
    %c0_32 = arith.constant 0 : index
    %131 = vector.load %arg0[%130, %c0_31, %c0_32] : memref<8x8x16xbf16, #tpu.memory_space<vmem>>, vector<1x8x16xbf16>
    %132 = vector.shape_cast %131 : vector<1x8x16xbf16> to vector<8x16xbf16>
    %cst_33 = arith.constant dense<0.000000e+00> : vector<8x128xf32>
    %133 = tpu.matmul %132, %0, %cst_33 {dimension_numbers = #tpu.dot_dimension_numbers<[1], [0], [0], [1], [0, 0, 1, 1], [], []>} : vector<8x16xbf16>, vector<16x128xbf16>, vector<8x128xf32> -> vector<8x128xf32>
    %134 = arith.truncf %129 : vector<8x32xf32> to vector<8x32xbf16>
    %cst_34 = arith.constant dense<0.000000e+00> : vector<8x128xf32>
    %135 = tpu.matmul %134, %1, %cst_34 {dimension_numbers = #tpu.dot_dimension_numbers<[1], [0], [0], [1], [0, 0, 1, 1], [], []>} : vector<8x32xbf16>, vector<32x128xbf16>, vector<8x128xf32> -> vector<8x128xf32>
    %136 = arith.addf %133, %135 : vector<8x128xf32>
    %137 = vector.broadcast %2 : vector<1x128xf32> to vector<8x128xf32>
    %138 = arith.addf %136, %137 : vector<8x128xf32>
    %139 = vector.extract_strided_slice %138 {offsets = [0, 0], sizes = [8, 96], strides = [1, 1]} : vector<8x128xf32> to vector<8x96xf32>
    %140 = arith.negf %139 : vector<8x96xf32>
    %141 = math.exp %140 : vector<8x96xf32>
    %cst_35 = arith.constant 1.000000e+00 : f32
    %142 = vector.broadcast %cst_35 : f32 to vector<8x96xf32>
    %143 = arith.addf %142, %141 : vector<8x96xf32>
    %144 = arith.divf %142, %143 : vector<8x96xf32>
    %145 = vector.extract_strided_slice %138 {offsets = [0, 96], sizes = [8, 32], strides = [1, 1]} : vector<8x128xf32> to vector<8x32xf32>
    %146 = math.tanh %145 : vector<8x32xf32>
    %147 = vector.extract_strided_slice %144 {offsets = [0, 0], sizes = [8, 32], strides = [1, 1]} : vector<8x96xf32> to vector<8x32xf32>
    %148 = vector.extract_strided_slice %144 {offsets = [0, 32], sizes = [8, 32], strides = [1, 1]} : vector<8x96xf32> to vector<8x32xf32>
    %149 = vector.extract_strided_slice %144 {offsets = [0, 64], sizes = [8, 32], strides = [1, 1]} : vector<8x96xf32> to vector<8x32xf32>
    %150 = arith.mulf %148, %127 : vector<8x32xf32>
    %151 = arith.mulf %147, %146 : vector<8x32xf32>
    %152 = arith.addf %150, %151 : vector<8x32xf32>
    %153 = math.tanh %152 : vector<8x32xf32>
    %154 = arith.mulf %149, %153 : vector<8x32xf32>
    %c6_i32 = arith.constant 6 : i32
    %155 = arith.index_cast %c6_i32 : i32 to index
    %c0_36 = arith.constant 0 : index
    %c0_37 = arith.constant 0 : index
    %156 = vector.load %arg0[%155, %c0_36, %c0_37] : memref<8x8x16xbf16, #tpu.memory_space<vmem>>, vector<1x8x16xbf16>
    %157 = vector.shape_cast %156 : vector<1x8x16xbf16> to vector<8x16xbf16>
    %cst_38 = arith.constant dense<0.000000e+00> : vector<8x128xf32>
    %158 = tpu.matmul %157, %0, %cst_38 {dimension_numbers = #tpu.dot_dimension_numbers<[1], [0], [0], [1], [0, 0, 1, 1], [], []>} : vector<8x16xbf16>, vector<16x128xbf16>, vector<8x128xf32> -> vector<8x128xf32>
    %159 = arith.truncf %154 : vector<8x32xf32> to vector<8x32xbf16>
    %cst_39 = arith.constant dense<0.000000e+00> : vector<8x128xf32>
    %160 = tpu.matmul %159, %1, %cst_39 {dimension_numbers = #tpu.dot_dimension_numbers<[1], [0], [0], [1], [0, 0, 1, 1], [], []>} : vector<8x32xbf16>, vector<32x128xbf16>, vector<8x128xf32> -> vector<8x128xf32>
    %161 = arith.addf %158, %160 : vector<8x128xf32>
    %162 = vector.broadcast %2 : vector<1x128xf32> to vector<8x128xf32>
    %163 = arith.addf %161, %162 : vector<8x128xf32>
    %164 = vector.extract_strided_slice %163 {offsets = [0, 0], sizes = [8, 96], strides = [1, 1]} : vector<8x128xf32> to vector<8x96xf32>
    %165 = arith.negf %164 : vector<8x96xf32>
    %166 = math.exp %165 : vector<8x96xf32>
    %cst_40 = arith.constant 1.000000e+00 : f32
    %167 = vector.broadcast %cst_40 : f32 to vector<8x96xf32>
    %168 = arith.addf %167, %166 : vector<8x96xf32>
    %169 = arith.divf %167, %168 : vector<8x96xf32>
    %170 = vector.extract_strided_slice %163 {offsets = [0, 96], sizes = [8, 32], strides = [1, 1]} : vector<8x128xf32> to vector<8x32xf32>
    %171 = math.tanh %170 : vector<8x32xf32>
    %172 = vector.extract_strided_slice %169 {offsets = [0, 0], sizes = [8, 32], strides = [1, 1]} : vector<8x96xf32> to vector<8x32xf32>
    %173 = vector.extract_strided_slice %169 {offsets = [0, 32], sizes = [8, 32], strides = [1, 1]} : vector<8x96xf32> to vector<8x32xf32>
    %174 = vector.extract_strided_slice %169 {offsets = [0, 64], sizes = [8, 32], strides = [1, 1]} : vector<8x96xf32> to vector<8x32xf32>
    %175 = arith.mulf %173, %152 : vector<8x32xf32>
    %176 = arith.mulf %172, %171 : vector<8x32xf32>
    %177 = arith.addf %175, %176 : vector<8x32xf32>
    %178 = math.tanh %177 : vector<8x32xf32>
    %179 = arith.mulf %174, %178 : vector<8x32xf32>
    %c7_i32 = arith.constant 7 : i32
    %180 = arith.index_cast %c7_i32 : i32 to index
    %c0_41 = arith.constant 0 : index
    %c0_42 = arith.constant 0 : index
    %181 = vector.load %arg0[%180, %c0_41, %c0_42] : memref<8x8x16xbf16, #tpu.memory_space<vmem>>, vector<1x8x16xbf16>
    %182 = vector.shape_cast %181 : vector<1x8x16xbf16> to vector<8x16xbf16>
    %cst_43 = arith.constant dense<0.000000e+00> : vector<8x128xf32>
    %183 = tpu.matmul %182, %0, %cst_43 {dimension_numbers = #tpu.dot_dimension_numbers<[1], [0], [0], [1], [0, 0, 1, 1], [], []>} : vector<8x16xbf16>, vector<16x128xbf16>, vector<8x128xf32> -> vector<8x128xf32>
    %184 = arith.truncf %179 : vector<8x32xf32> to vector<8x32xbf16>
    %cst_44 = arith.constant dense<0.000000e+00> : vector<8x128xf32>
    %185 = tpu.matmul %184, %1, %cst_44 {dimension_numbers = #tpu.dot_dimension_numbers<[1], [0], [0], [1], [0, 0, 1, 1], [], []>} : vector<8x32xbf16>, vector<32x128xbf16>, vector<8x128xf32> -> vector<8x128xf32>
    %186 = arith.addf %183, %185 : vector<8x128xf32>
    %187 = vector.broadcast %2 : vector<1x128xf32> to vector<8x128xf32>
    %188 = arith.addf %186, %187 : vector<8x128xf32>
    %189 = vector.extract_strided_slice %188 {offsets = [0, 0], sizes = [8, 96], strides = [1, 1]} : vector<8x128xf32> to vector<8x96xf32>
    %190 = arith.negf %189 : vector<8x96xf32>
    %191 = math.exp %190 : vector<8x96xf32>
    %cst_45 = arith.constant 1.000000e+00 : f32
    %192 = vector.broadcast %cst_45 : f32 to vector<8x96xf32>
    %193 = arith.addf %192, %191 : vector<8x96xf32>
    %194 = arith.divf %192, %193 : vector<8x96xf32>
    %195 = vector.extract_strided_slice %188 {offsets = [0, 96], sizes = [8, 32], strides = [1, 1]} : vector<8x128xf32> to vector<8x32xf32>
    %196 = math.tanh %195 : vector<8x32xf32>
    %197 = vector.extract_strided_slice %194 {offsets = [0, 0], sizes = [8, 32], strides = [1, 1]} : vector<8x96xf32> to vector<8x32xf32>
    %198 = vector.extract_strided_slice %194 {offsets = [0, 32], sizes = [8, 32], strides = [1, 1]} : vector<8x96xf32> to vector<8x32xf32>
    %199 = vector.extract_strided_slice %194 {offsets = [0, 64], sizes = [8, 32], strides = [1, 1]} : vector<8x96xf32> to vector<8x32xf32>
    %200 = arith.mulf %198, %177 : vector<8x32xf32>
    %201 = arith.mulf %197, %196 : vector<8x32xf32>
    %202 = arith.addf %200, %201 : vector<8x32xf32>
    %203 = math.tanh %202 : vector<8x32xf32>
    %204 = arith.mulf %199, %203 : vector<8x32xf32>
    %c8_i32 = arith.constant 8 : i32
    %c0_46 = arith.constant 0 : index
    %c0_47 = arith.constant 0 : index
    %205 = vector.load %arg4[%c0_46, %c0_47] : memref<8x32xf32, #tpu.memory_space<vmem>>, vector<8x32xf32>
    tpu.vector_store %arg4[%c0_46, %c0_47], %204 {strides = array<i32>} : memref<8x32xf32, #tpu.memory_space<vmem>>, vector<8x32xf32>,
    return
  }
}

</mosaic_0001>

<llo_original>
// kernel: tpu_custom_call.1
$region0: #{tpu_custom_call.1}
  #allocation0 [shape = 'u32[]', space=smem, size = 0x4, offset = 0x4, fixed_abs, tag = 'smem constant byte address 0x4 - core index']
  #allocation1 [shape = 'u32[144,128]{1,0:T(1,128)}', space=vmem, size = 0x12000, scoped, tag = 'internal scratch']
  %s0 = inlined_call_operand.hbm [shape: bf16[8,8,16], index: 0, kind: input, shape index: {}]
  %s1 = inlined_call_operand.hbm [shape: bf16[16,128], index: 1, kind: input, shape index: {}]
  %s2 = inlined_call_operand.hbm [shape: bf16[32,128], index: 2, kind: input, shape index: {}]
  %s3 = inlined_call_operand.vmem [shape: f32[1,128], index: 3, kind: input, shape index: {}]
  %s4 = inlined_call_operand.hbm [shape: f32[8,32], index: 4, kind: output, shape index: {}]
  %s5 = sld [smem:[#allocation0]]
  $region38: #{tpu_custom_call.1} parent=0
    _
  %s7 = ssub.s32 1, %s5
  %s8 = scalar_select 0, %s7, %s5
  $region1: #{tpu_custom_call.1} parent=0
    #allocation2 [shape = 'u8[16384]{0}', space=vmem, size = 0x4000, scoped, tag = 'input window, operand 0, single buffered']
    #allocation3 [shape = 's32[1]{0}', space=sflag, size = 0x4, scoped, tag = 'scoped memory for tpu_custom_call.1']
    #allocation4 [shape = 's32[1]{0}', space=sflag, size = 0x4, scoped, tag = 'scoped memory for tpu_custom_call.1']
    #allocation5 [shape = 'u8[4096]{0}', space=vmem, size = 0x1000, scoped, tag = 'input window, operand 1, single buffered']
    #allocation6 [shape = 's32[1]{0}', space=sflag, size = 0x4, scoped, tag = 'scoped memory for tpu_custom_call.1']
    #allocation7 [shape = 'u8[8192]{0}', space=vmem, size = 0x2000, scoped, tag = 'input window, operand 2, single buffered']
    #allocation8 [shape = 'u8[4096]{0}', space=vmem, size = 0x1000, scoped, tag = 'output window, operand 0, single buffered']
    %9 = vsyncpa [#allocation3], 0
    %10 = vsyncpa [#allocation6], 0
    %11 = vsyncpa [#allocation4], 0
    // Predicated region
    $region2: #{tpu_custom_call.1} parent=1 // pred_check
      _
    $region3: #{tpu_custom_call.1} parent=1 // pred_check_branch
      %13 = sbr.rel (0) target = $region5
    $region4: #{tpu_custom_call.1} parent=1 // pred_region
      %s15 = ssub.s32 512, 512
      %16 = vsyncadd [#allocation3], %s15
      %s17 = sshll.u32 [#allocation2], 4
      %s18 = int_to_ptr.vmem [resolvable:$true] %s17
      %23 = dma.hbm_to_vmem [thread:$0]  %s0, 512, %s18, [#allocation3], 64, 64, 4
    $region5: #{tpu_custom_call.1} parent=1 // pred_fallthru
      _
    // Predicated region
    $region6: #{tpu_custom_call.1} parent=1 // pred_check
      _
    $region7: #{tpu_custom_call.1} parent=1 // pred_check_branch
      %25 = sbr.rel (0) target = $region9
    $region8: #{tpu_custom_call.1} parent=1 // pred_region
      %s27 = ssub.s32 128, 128
      %28 = vsyncadd [#allocation6], %s27
      %s29 = sshll.u32 [#allocation5], 4
      %s30 = int_to_ptr.vmem [resolvable:$true] %s29
      %35 = dma.hbm_to_vmem [thread:$0]  %s1, 128, %s30, [#allocation6], 64, 64, 4
    $region9: #{tpu_custom_call.1} parent=1 // pred_fallthru
      _
    // Predicated region
    $region10: #{tpu_custom_call.1} parent=1 // pred_check
      _
    $region11: #{tpu_custom_call.1} parent=1 // pred_check_branch
      %37 = sbr.rel (0) target = $region13
    $region12: #{tpu_custom_call.1} parent=1 // pred_region
      %s39 = ssub.s32 256, 256
      %40 = vsyncadd [#allocation6], %s39
      %s41 = sshll.u32 [#allocation7], 4
      %s42 = int_to_ptr.vmem [resolvable:$true] %s41
      %47 = dma.hbm_to_vmem [thread:$0]  %s2, 256, %s42, [#allocation6], 64, 64, 4
    $region13: #{tpu_custom_call.1} parent=1 // pred_fallthru
      _
    // Predicated region
    $region14: #{tpu_custom_call.1} parent=1 // pred_check
      _
    $region15: #{tpu_custom_call.1} parent=1 // pred_check_branch
      %49 = sbr.rel (0) target = $region17
    $region16: #{tpu_custom_call.1} parent=1 // pred_region
      _
    $region17: #{tpu_custom_call.1} parent=1 // pred_fallthru
      _
    // Predicated region
    $region18: #{tpu_custom_call.1} parent=1 // pred_check
      _
    $region19: #{tpu_custom_call.1} parent=1 // pred_check_branch
      %51 = sbr.rel (0) target = $region21
    $region20: #{tpu_custom_call.1} parent=1 // pred_region
      %52 = dma.done [#allocation3], 512
    $region21: #{tpu_custom_call.1} parent=1 // pred_fallthru
      _
    // Predicated region
    $region22: #{tpu_custom_call.1} parent=1 // pred_check
      _
    $region23: #{tpu_custom_call.1} parent=1 // pred_check_branch
      %54 = sbr.rel (0) target = $region25
    $region24: #{tpu_custom_call.1} parent=1 // pred_region
      %55 = dma.done [#allocation6], 128
    $region25: #{tpu_custom_call.1} parent=1 // pred_fallthru
      _
    // Predicated region
    $region26: #{tpu_custom_call.1} parent=1 // pred_check
      _
    $region27: #{tpu_custom_call.1} parent=1 // pred_check_branch
      %57 = sbr.rel (0) target = $region29
    $region28: #{tpu_custom_call.1} parent=1 // pred_region
      %58 = dma.done [#allocation6], 256
    $region29: #{tpu_custom_call.1} parent=1 // pred_fallthru
      _
    %v60 = vld [vmem:[#allocation5] sm:$0xf]
    %v61 = vld [vmem:[#allocation5 + $0x4] sm:$0xf]
    %v62 = vld [vmem:[#allocation7] sm:$0xf]
    %v63 = vld [vmem:[#allocation7 + $0x4] sm:$0xf]
    %v64 = vld [vmem:[#allocation7 + $0x8] sm:$0xf]
    %v65 = vld [vmem:[#allocation7 + $0xc] sm:$0xf]
    %v66 = vld [vmem:[%s3] sm:$0x1]
    %v67 = vld [vmem:[#allocation2] sm:$0xf]
    %v72 = vunpack.c.l.b16 %v62
    %v73 = vunpack.c.l.b16 %v63
    %v74 = vunpack.c.l.b16 %v64
    %v75 = vunpack.c.l.b16 %v65
    %v76 = vpack.c.b16 %v73, %v72
    %v77 = vpack.c.b16 %v75, %v74
    %vm80 = vcmask 261120
    %v82 = vsel %vm80, 0, 0
    %84 = vmatprep.subr.bf16.mxu0 0
    %85 = vmatpush1.bf16.msra.mxu0 0
    %86 = vmatprep.subr.bf16.mxu0 0
    %87 = vmatpush1.bf16.msra.mxu0 0
    %88 = vmatprep.subr.bf16.mxu0 0
    %89 = vmatpush1.bf16.msra.mxu0 0
    %90 = vmatprep.subr.bf16.mxu0 0
    %91 = vmatpush1.bf16.msra.mxu0 0
    %92 = vmatprep.subr.bf16.mxu0 0
    %93 = vmatpush1.bf16.msra.mxu0 0
    %94 = vmatprep.subr.bf16.mxu0 0
    %95 = vmatpush1.bf16.msra.mxu0 0
    %96 = vmatprep.subr.bf16.mxu0 0
    %97 = vmatpush1.bf16.msra.mxu0 %v77
    %98 = vmatprep.subr.bf16.mxu0 0
    %99 = vmatpush1.bf16.msra.mxu0 %v76
    %100 = vmatprep.subr.bf16.mxu0 0
    %101 = vmatpush2.bf16.msra.mxu0 0
    %102 = vmatprep.subr.bf16.mxu0 0
    %103 = vmatpush2.bf16.msra.mxu0 0
    %104 = vmatprep.subr.bf16.mxu0 0
    %105 = vmatpush2.bf16.msra.mxu0 0
    %106 = vmatprep.subr.bf16.mxu0 0
    %107 = vmatpush2.bf16.msra.mxu0 0
    %108 = vmatprep.subr.bf16.mxu0 0
    %109 = vmatpush2.bf16.msra.mxu0 0
    %110 = vmatprep.subr.bf16.mxu0 0
    %111 = vmatpush2.bf16.msra.mxu0 0
    %112 = vmatprep.subr.bf16.mxu0 0
    %113 = vmatpush2.bf16.msra.mxu0 0
    %114 = vmatprep.subr.bf16.mxu0 0
    %115 = vmatpush2.bf16.msra.mxu0 0
    %116 = vmatprep.mubr.bf16.mxu0 0
    %117 = vmatmul.mubr.bf16.gmra.mxu0 %v82
    %v118 = vpop.f32.mrf.mxu0
    %v119 = vadd.f32 0.0, %v118
    %v120 = vpop.f32.mrf.mxu0
    %v121 = vpop.f32.mrf.mxu0
    %v122 = vpop.f32.mrf.mxu0
    %123 = vdwg.mxu0
    %v126 = vunpack.c.l.b16 %v60
    %v127 = vunpack.c.l.b16 %v61
    %v128 = vpack.c.b16 %v127, %v126
    %vm130 = vcmask 130048
    %v132 = vsel %vm130, %v67, 0
    %134 = vmatprep.subr.bf16.mxu0 0
    %135 = vmatpush1.bf16.msra.mxu0 0
    %136 = vmatprep.subr.bf16.mxu0 0
    %137 = vmatpush1.bf16.msra.mxu0 0
    %138 = vmatprep.subr.bf16.mxu0 0
    %139 = vmatpush1.bf16.msra.mxu0 0
    %140 = vmatprep.subr.bf16.mxu0 0
    %141 = vmatpush1.bf16.msra.mxu0 0
    %142 = vmatprep.subr.bf16.mxu0 0
    %143 = vmatpush1.bf16.msra.mxu0 0
    %144 = vmatprep.subr.bf16.mxu0 0
    %145 = vmatpush1.bf16.msra.mxu0 0
    %146 = vmatprep.subr.bf16.mxu0 0
    %147 = vmatpush1.bf16.msra.mxu0 0
    %148 = vmatprep.subr.bf16.mxu0 0
    %149 = vmatpush1.bf16.msra.mxu0 %v128
    %150 = vmatprep.subr.bf16.mxu0 0
    %151 = vmatpush2.bf16.msra.mxu0 0
    %152 = vmatprep.subr.bf16.mxu0 0
    %153 = vmatpush2.bf16.msra.mxu0 0
    %154 = vmatprep.subr.bf16.mxu0 0
    %155 = vmatpush2.bf16.msra.mxu0 0
    %156 = vmatprep.subr.bf16.mxu0 0
    %157 = vmatpush2.bf16.msra.mxu0 0
    %158 = vmatprep.subr.bf16.mxu0 0
    %159 = vmatpush2.bf16.msra.mxu0 0
    %160 = vmatprep.subr.bf16.mxu0 0
    %161 = vmatpush2.bf16.msra.mxu0 0
    %162 = vmatprep.subr.bf16.mxu0 0
    %163 = vmatpush2.bf16.msra.mxu0 0
    %164 = vmatprep.subr.bf16.mxu0 0
    %165 = vmatpush2.bf16.msra.mxu0 0
    %166 = vmatprep.mubr.bf16.mxu0 0
    %167 = vmatmul.mubr.bf16.gmra.mxu0 %v132
    %v168 = vpop.f32.mrf.mxu0
    %v169 = vadd.f32 %v119, %v168
    %v170 = vpop.f32.mrf.mxu0
    %v171 = vpop.f32.mrf.mxu0
    %v172 = vpop.f32.mrf.mxu0
    %173 = vdwg.mxu0
    %v175 = vlaneseq
    %v176 = vshrl.u32 %v175, 7
    %v177 = vsub.s32 0, %v176
    %v178 = vrot.slane %v66, %v177
    %v180 = vadd.f32 %v169, %v178
    %v181 = vxor.u32 %v180, 2147483648
    %v182 = vmul.f32 %v181, 1.442695
    %v183 = vpow.pop %v182
    %v184 = vadd.f32 %v183, 1.0
    %v185 = vrcp.pop %v184
    %v186 = vmul.f32 1.0, %v185
    %v187 = vtanh.pop %v180
    %v188 = vmul.f32 %v186, 0.0
    %190 = vrot.lane.b32.xlu0 %v187, 32
    %v191 = vpop.permute.xlu0 %190
    %v193 = vmul.f32 %v186, %v191
    %195 = vrot.lane.b32.xlu0 %v193, 32
    %v196 = vpop.permute.xlu0 %195
    %v198 = vadd.f32 %v188, %v196
    %v199 = vtanh.pop %v198
    %201 = vrot.lane.b32.xlu0 %v199, 32
    %v202 = vpop.permute.xlu0 %201
    %v204 = vmul.f32 %v186, %v202
    %s205 = scalar_lea.vmem [#allocation2], 4
    %v206 = vld [vmem:[%s205] sm:$0xf]
    %v207 = vpack.c.bf16 %v204, %v204
    %209 = vrot.lane.b32.xlu0 %v207, 64
    %v210 = vpop.permute.xlu0 %209
    %v212 = vsel %vm80, %v210, 0
    %214 = vmatprep.subr.bf16.mxu0 0
    %215 = vmatpush1.bf16.msra.mxu0 0
    %216 = vmatprep.subr.bf16.mxu0 0
    %217 = vmatpush1.bf16.msra.mxu0 0
    %218 = vmatprep.subr.bf16.mxu0 0
    %219 = vmatpush1.bf16.msra.mxu0 0
    %220 = vmatprep.subr.bf16.mxu0 0
    %221 = vmatpush1.bf16.msra.mxu0 0
    %222 = vmatprep.subr.bf16.mxu0 0
    %223 = vmatpush1.bf16.msra.mxu0 0
    %224 = vmatprep.subr.bf16.mxu0 0
    %225 = vmatpush1.bf16.msra.mxu0 0
    %226 = vmatprep.subr.bf16.mxu0 0
    %227 = vmatpush1.bf16.msra.mxu0 %v77
    %228 = vmatprep.subr.bf16.mxu0 0
    %229 = vmatpush1.bf16.msra.mxu0 %v76
    %230 = vmatprep.subr.bf16.mxu0 0
    %231 = vmatpush2.bf16.msra.mxu0 0
    %232 = vmatprep.subr.bf16.mxu0 0
    %233 = vmatpush2.bf16.msra.mxu0 0
    %234 = vmatprep.subr.bf16.mxu0 0
    %235 = vmatpush2.bf16.msra.mxu0 0
    %236 = vmatprep.subr.bf16.mxu0 0
    %237 = vmatpush2.bf16.msra.mxu0 0
    %238 = vmatprep.subr.bf16.mxu0 0
    %239 = vmatpush2.bf16.msra.mxu0 0
    %240 = vmatprep.subr.bf16.mxu0 0
    %241 = vmatpush2.bf16.msra.mxu0 0
    %242 = vmatprep.subr.bf16.mxu0 0
    %243 = vmatpush2.bf16.msra.mxu0 0
    %244 = vmatprep.subr.bf16.mxu0 0
    %245 = vmatpush2.bf16.msra.mxu0 0
    %246 = vmatprep.mubr.bf16.mxu0 0
    %247 = vmatmul.mubr.bf16.gmra.mxu0 %v212
    %v248 = vpop.f32.mrf.mxu0
    %v249 = vadd.f32 0.0, %v248
    %v250 = vpop.f32.mrf.mxu0
    %v251 = vpop.f32.mrf.mxu0
    %v252 = vpop.f32.mrf.mxu0
    %253 = vdwg.mxu0
    %v255 = vsel %vm130, %v206, 0
    %257 = vmatprep.subr.bf16.mxu0 0
    %258 = vmatpush1.bf16.msra.mxu0 0
    %259 = vmatprep.subr.bf16.mxu0 0
    %260 = vmatpush1.bf16.msra.mxu0 0
    %261 = vmatprep.subr.bf16.mxu0 0
    %262 = vmatpush1.bf16.msra.mxu0 0
    %263 = vmatprep.subr.bf16.mxu0 0
    %264 = vmatpush1.bf16.msra.mxu0 0
    %265 = vmatprep.subr.bf16.mxu0 0
    %266 = vmatpush1.bf16.msra.mxu0 0
    %267 = vmatprep.subr.bf16.mxu0 0
    %268 = vmatpush1.bf16.msra.mxu0 0
    %269 = vmatprep.subr.bf16.mxu0 0
    %270 = vmatpush1.bf16.msra.mxu0 0
    %271 = vmatprep.subr.bf16.mxu0 0
    %272 = vmatpush1.bf16.msra.mxu0 %v128
    %273 = vmatprep.subr.bf16.mxu0 0
    %274 = vmatpush2.bf16.msra.mxu0 0
    %275 = vmatprep.subr.bf16.mxu0 0
    %276 = vmatpush2.bf16.msra.mxu0 0
    %277 = vmatprep.subr.bf16.mxu0 0
    %278 = vmatpush2.bf16.msra.mxu0 0
    %279 = vmatprep.subr.bf16.mxu0 0
    %280 = vmatpush2.bf16.msra.mxu0 0
    %281 = vmatprep.subr.bf16.mxu0 0
    %282 = vmatpush2.bf16.msra.mxu0 0
    %283 = vmatprep.subr.bf16.mxu0 0
    %284 = vmatpush2.bf16.msra.mxu0 0
    %285 = vmatprep.subr.bf16.mxu0 0
    %286 = vmatpush2.bf16.msra.mxu0 0
    %287 = vmatprep.subr.bf16.mxu0 0
    %288 = vmatpush2.bf16.msra.mxu0 0
    %289 = vmatprep.mubr.bf16.mxu0 0
    %290 = vmatmul.mubr.bf16.gmra.mxu0 %v255
    %v291 = vpop.f32.mrf.mxu0
    %v292 = vadd.f32 %v249, %v291
    %v293 = vpop.f32.mrf.mxu0
    %v294 = vpop.f32.mrf.mxu0
    %v295 = vpop.f32.mrf.mxu0
    %296 = vdwg.mxu0
    %v297 = vadd.f32 %v292, %v178
    %v298 = vxor.u32 %v297, 2147483648
    %v299 = vmul.f32 %v298, 1.442695
    %v300 = vpow.pop %v299
    %v301 = vadd.f32 %v300, 1.0
    %v302 = vrcp.pop %v301
    %v303 = vmul.f32 1.0, %v302
    %v304 = vtanh.pop %v297
    %v305 = vmul.f32 %v303, %v198
    %307 = vrot.lane.b32.xlu0 %v304, 32
    %v308 = vpop.permute.xlu0 %307
    %v310 = vmul.f32 %v303, %v308
    %312 = vrot.lane.b32.xlu0 %v310, 32
    %v313 = vpop.permute.xlu0 %312
    %v315 = vadd.f32 %v305, %v313
    %v316 = vtanh.pop %v315
    %318 = vrot.lane.b32.xlu0 %v316, 32
    %v319 = vpop.permute.xlu0 %318
    %v321 = vmul.f32 %v303, %v319
    %s322 = scalar_lea.vmem [#allocation2], 8
    %v323 = vld [vmem:[%s322] sm:$0xf]
    %v324 = vpack.c.bf16 %v321, %v321
    %326 = vrot.lane.b32.xlu0 %v324, 64
    %v327 = vpop.permute.xlu0 %326
    %v329 = vsel %vm80, %v327, 0
    %331 = vmatprep.subr.bf16.mxu0 0
    %332 = vmatpush1.bf16.msra.mxu0 0
    %333 = vmatprep.subr.bf16.mxu0 0
    %334 = vmatpush1.bf16.msra.mxu0 0
    %335 = vmatprep.subr.bf16.mxu0 0
    %336 = vmatpush1.bf16.msra.mxu0 0
    %337 = vmatprep.subr.bf16.mxu0 0
    %338 = vmatpush1.bf16.msra.mxu0 0
    %339 = vmatprep.subr.bf16.mxu0 0
    %340 = vmatpush1.bf16.msra.mxu0 0
    %341 = vmatprep.subr.bf16.mxu0 0
    %342 = vmatpush1.bf16.msra.mxu0 0
    %343 = vmatprep.subr.bf16.mxu0 0
    %344 = vmatpush1.bf16.msra.mxu0 %v77
    %345 = vmatprep.subr.bf16.mxu0 0
    %346 = vmatpush1.bf16.msra.mxu0 %v76
    %347 = vmatprep.subr.bf16.mxu0 0
    %348 = vmatpush2.bf16.msra.mxu0 0
    %349 = vmatprep.subr.bf16.mxu0 0
    %350 = vmatpush2.bf16.msra.mxu0 0
    %351 = vmatprep.subr.bf16.mxu0 0
    %352 = vmatpush2.bf16.msra.mxu0 0
    %353 = vmatprep.subr.bf16.mxu0 0
    %354 = vmatpush2.bf16.msra.mxu0 0
    %355 = vmatprep.subr.bf16.mxu0 0
    %356 = vmatpush2.bf16.msra.mxu0 0
    %357 = vmatprep.subr.bf16.mxu0 0
    %358 = vmatpush2.bf16.msra.mxu0 0
    %359 = vmatprep.subr.bf16.mxu0 0
    %360 = vmatpush2.bf16.msra.mxu0 0
    %361 = vmatprep.subr.bf16.mxu0 0
    %362 = vmatpush2.bf16.msra.mxu0 0
    %363 = vmatprep.mubr.bf16.mxu0 0
    %364 = vmatmul.mubr.bf16.gmra.mxu0 %v329
    %v365 = vpop.f32.mrf.mxu0
    %v366 = vadd.f32 0.0, %v365
    %v367 = vpop.f32.mrf.mxu0
    %v368 = vpop.f32.mrf.mxu0
    %v369 = vpop.f32.mrf.mxu0
    %370 = vdwg.mxu0
    %v372 = vsel %vm130, %v323, 0
    %374 = vmatprep.subr.bf16.mxu0 0
    %375 = vmatpush1.bf16.msra.mxu0 0
    %376 = vmatprep.subr.bf16.mxu0 0
    %377 = vmatpush1.bf16.msra.mxu0 0
    %378 = vmatprep.subr.bf16.mxu0 0
    %379 = vmatpush1.bf16.msra.mxu0 0
    %380 = vmatprep.subr.bf16.mxu0 0
    %381 = vmatpush1.bf16.msra.mxu0 0
    %382 = vmatprep.subr.bf16.mxu0 0
    %383 = vmatpush1.bf16.msra.mxu0 0
    %384 = vmatprep.subr.bf16.mxu0 0
    %385 = vmatpush1.bf16.msra.mxu0 0
    %386 = vmatprep.subr.bf16.mxu0 0
    %387 = vmatpush1.bf16.msra.mxu0 0
    %388 = vmatprep.subr.bf16.mxu0 0
    %389 = vmatpush1.bf16.msra.mxu0 %v128
    %390 = vmatprep.subr.bf16.mxu0 0
    %391 = vmatpush2.bf16.msra.mxu0 0
    %392 = vmatprep.subr.bf16.mxu0 0
    %393 = vmatpush2.bf16.msra.mxu0 0
    %394 = vmatprep.subr.bf16.mxu0 0
    %395 = vmatpush2.bf16.msra.mxu0 0
    %396 = vmatprep.subr.bf16.mxu0 0
    %397 = vmatpush2.bf16.msra.mxu0 0
    %398 = vmatprep.subr.bf16.mxu0 0
    %399 = vmatpush2.bf16.msra.mxu0 0
    %400 = vmatprep.subr.bf16.mxu0 0
    %401 = vmatpush2.bf16.msra.mxu0 0
    %402 = vmatprep.subr.bf16.mxu0 0
    %403 = vmatpush2.bf16.msra.mxu0 0
    %404 = vmatprep.subr.bf16.mxu0 0
    %405 = vmatpush2.bf16.msra.mxu0 0
    %406 = vmatprep.mubr.bf16.mxu0 0
    %407 = vmatmul.mubr.bf16.gmra.mxu0 %v372
    %v408 = vpop.f32.mrf.mxu0
    %v409 = vadd.f32 %v366, %v408
    %v410 = vpop.f32.mrf.mxu0
    %v411 = vpop.f32.mrf.mxu0
    %v412 = vpop.f32.mrf.mxu0
    %413 = vdwg.mxu0
    %v414 = vadd.f32 %v409, %v178
    %v415 = vxor.u32 %v414, 2147483648
    %v416 = vmul.f32 %v415, 1.442695
    %v417 = vpow.pop %v416
    %v418 = vadd.f32 %v417, 1.0
    %v419 = vrcp.pop %v418
    %v420 = vmul.f32 1.0, %v419
    %v421 = vtanh.pop %v414
    %v422 = vmul.f32 %v420, %v315
    %424 = vrot.lane.b32.xlu0 %v421, 32
    %v425 = vpop.permute.xlu0 %424
    %v427 = vmul.f32 %v420, %v425
    %429 = vrot.lane.b32.xlu0 %v427, 32
    %v430 = vpop.permute.xlu0 %429
    %v432 = vadd.f32 %v422, %v430
    %v433 = vtanh.pop %v432
    %435 = vrot.lane.b32.xlu0 %v433, 32
    %v436 = vpop.permute.xlu0 %435
    %v438 = vmul.f32 %v420, %v436
    %s439 = scalar_lea.vmem [#allocation2], 12
    %v440 = vld [vmem:[%s439] sm:$0xf]
    %v441 = vpack.c.bf16 %v438, %v438
    %443 = vrot.lane.b32.xlu0 %v441, 64
    %v444 = vpop.permute.xlu0 %443
    %v446 = vsel %vm80, %v444, 0
    %448 = vmatprep.subr.bf16.mxu0 0
    %449 = vmatpush1.bf16.msra.mxu0 0
    %450 = vmatprep.subr.bf16.mxu0 0
    %451 = vmatpush1.bf16.msra.mxu0 0
    %452 = vmatprep.subr.bf16.mxu0 0
    %453 = vmatpush1.bf16.msra.mxu0 0
    %454 = vmatprep.subr.bf16.mxu0 0
    %455 = vmatpush1.bf16.msra.mxu0 0
    %456 = vmatprep.subr.bf16.mxu0 0
    %457 = vmatpush1.bf16.msra.mxu0 0
    %458 = vmatprep.subr.bf16.mxu0 0
    %459 = vmatpush1.bf16.msra.mxu0 0
    %460 = vmatprep.subr.bf16.mxu0 0
    %461 = vmatpush1.bf16.msra.mxu0 %v77
    %462 = vmatprep.subr.bf16.mxu0 0
    %463 = vmatpush1.bf16.msra.mxu0 %v76
    %464 = vmatprep.subr.bf16.mxu0 0
    %465 = vmatpush2.bf16.msra.mxu0 0
    %466 = vmatprep.subr.bf16.mxu0 0
    %467 = vmatpush2.bf16.msra.mxu0 0
    %468 = vmatprep.subr.bf16.mxu0 0
    %469 = vmatpush2.bf16.msra.mxu0 0
    %470 = vmatprep.subr.bf16.mxu0 0
    %471 = vmatpush2.bf16.msra.mxu0 0
    %472 = vmatprep.subr.bf16.mxu0 0
    %473 = vmatpush2.bf16.msra.mxu0 0
    %474 = vmatprep.subr.bf16.mxu0 0
    %475 = vmatpush2.bf16.msra.mxu0 0
    %476 = vmatprep.subr.bf16.mxu0 0
    %477 = vmatpush2.bf16.msra.mxu0 0
    %478 = vmatprep.subr.bf16.mxu0 0
    %479 = vmatpush2.bf16.msra.mxu0 0
    %480 = vmatprep.mubr.bf16.mxu0 0
    %481 = vmatmul.mubr.bf16.gmra.mxu0 %v446
    %v482 = vpop.f32.mrf.mxu0
    %v483 = vadd.f32 0.0, %v482
    %v484 = vpop.f32.mrf.mxu0
    %v485 = vpop.f32.mrf.mxu0
    %v486 = vpop.f32.mrf.mxu0
    %487 = vdwg.mxu0
    %v489 = vsel %vm130, %v440, 0
    %491 = vmatprep.subr.bf16.mxu0 0
    %492 = vmatpush1.bf16.msra.mxu0 0
    %493 = vmatprep.subr.bf16.mxu0 0
    %494 = vmatpush1.bf16.msra.mxu0 0
    %495 = vmatprep.subr.bf16.mxu0 0
    %496 = vmatpush1.bf16.msra.mxu0 0
    %497 = vmatprep.subr.bf16.mxu0 0
    %498 = vmatpush1.bf16.msra.mxu0 0
    %499 = vmatprep.subr.bf16.mxu0 0
    %500 = vmatpush1.bf16.msra.mxu0 0
    %501 = vmatprep.subr.bf16.mxu0 0
    %502 = vmatpush1.bf16.msra.mxu0 0
    %503 = vmatprep.subr.bf16.mxu0 0
    %504 = vmatpush1.bf16.msra.mxu0 0
    %505 = vmatprep.subr.bf16.mxu0 0
    %506 = vmatpush1.bf16.msra.mxu0 %v128
    %507 = vmatprep.subr.bf16.mxu0 0
    %508 = vmatpush2.bf16.msra.mxu0 0
    %509 = vmatprep.subr.bf16.mxu0 0
    %510 = vmatpush2.bf16.msra.mxu0 0
    %511 = vmatprep.subr.bf16.mxu0 0
    %512 = vmatpush2.bf16.msra.mxu0 0
    %513 = vmatprep.subr.bf16.mxu0 0
    %514 = vmatpush2.bf16.msra.mxu0 0
    %515 = vmatprep.subr.bf16.mxu0 0
    %516 = vmatpush2.bf16.msra.mxu0 0
    %517 = vmatprep.subr.bf16.mxu0 0
    %518 = vmatpush2.bf16.msra.mxu0 0
    %519 = vmatprep.subr.bf16.mxu0 0
    %520 = vmatpush2.bf16.msra.mxu0 0
    %521 = vmatprep.subr.bf16.mxu0 0
    %522 = vmatpush2.bf16.msra.mxu0 0
    %523 = vmatprep.mubr.bf16.mxu0 0
    %524 = vmatmul.mubr.bf16.gmra.mxu0 %v489
    %v525 = vpop.f32.mrf.mxu0
    %v526 = vadd.f32 %v483, %v525
    %v527 = vpop.f32.mrf.mxu0
    %v528 = vpop.f32.mrf.mxu0
    %v529 = vpop.f32.mrf.mxu0
    %530 = vdwg.mxu0
    %v531 = vadd.f32 %v526, %v178
    %v532 = vxor.u32 %v531, 2147483648
    %v533 = vmul.f32 %v532, 1.442695
    %v534 = vpow.pop %v533
    %v535 = vadd.f32 %v534, 1.0
    %v536 = vrcp.pop %v535
    %v537 = vmul.f32 1.0, %v536
    %v538 = vtanh.pop %v531
    %v539 = vmul.f32 %v537, %v432
    %541 = vrot.lane.b32.xlu0 %v538, 32
    %v542 = vpop.permute.xlu0 %541
    %v544 = vmul.f32 %v537, %v542
    %546 = vrot.lane.b32.xlu0 %v544, 32
    %v547 = vpop.permute.xlu0 %546
    %v549 = vadd.f32 %v539, %v547
    %v550 = vtanh.pop %v549
    %552 = vrot.lane.b32.xlu0 %v550, 32
    %v553 = vpop.permute.xlu0 %552
    %v555 = vmul.f32 %v537, %v553
    %s556 = scalar_lea.vmem [#allocation2], 16
    %v557 = vld [vmem:[%s556] sm:$0xf]
    %v558 = vpack.c.bf16 %v555, %v555
    %560 = vrot.lane.b32.xlu0 %v558, 64
    %v561 = vpop.permute.xlu0 %560
    %v563 = vsel %vm80, %v561, 0
    %565 = vmatprep.subr.bf16.mxu0 0
    %566 = vmatpush1.bf16.msra.mxu0 0
    %567 = vmatprep.subr.bf16.mxu0 0
    %568 = vmatpush1.bf16.msra.mxu0 0
    %569 = vmatprep.subr.bf16.mxu0 0
    %570 = vmatpush1.bf16.msra.mxu0 0
    %571 = vmatprep.subr.bf16.mxu0 0
    %572 = vmatpush1.bf16.msra.mxu0 0
    %573 = vmatprep.subr.bf16.mxu0 0
    %574 = vmatpush1.bf16.msra.mxu0 0
    %575 = vmatprep.subr.bf16.mxu0 0
    %576 = vmatpush1.bf16.msra.mxu0 0
    %577 = vmatprep.subr.bf16.mxu0 0
    %578 = vmatpush1.bf16.msra.mxu0 %v77
    %579 = vmatprep.subr.bf16.mxu0 0
    %580 = vmatpush1.bf16.msra.mxu0 %v76
    %581 = vmatprep.subr.bf16.mxu0 0
    %582 = vmatpush2.bf16.msra.mxu0 0
    %583 = vmatprep.subr.bf16.mxu0 0
    %584 = vmatpush2.bf16.msra.mxu0 0
    %585 = vmatprep.subr.bf16.mxu0 0
    %586 = vmatpush2.bf16.msra.mxu0 0
    %587 = vmatprep.subr.bf16.mxu0 0
    %588 = vmatpush2.bf16.msra.mxu0 0
    %589 = vmatprep.subr.bf16.mxu0 0
    %590 = vmatpush2.bf16.msra.mxu0 0
    %591 = vmatprep.subr.bf16.mxu0 0
    %592 = vmatpush2.bf16.msra.mxu0 0
    %593 = vmatprep.subr.bf16.mxu0 0
    %594 = vmatpush2.bf16.msra.mxu0 0
    %595 = vmatprep.subr.bf16.mxu0 0
    %596 = vmatpush2.bf16.msra.mxu0 0
    %597 = vmatprep.mubr.bf16.mxu0 0
    %598 = vmatmul.mubr.bf16.gmra.mxu0 %v563
    %v599 = vpop.f32.mrf.mxu0
    %v600 = vadd.f32 0.0, %v599
    %v601 = vpop.f32.mrf.mxu0
    %v602 = vpop.f32.mrf.mxu0
    %v603 = vpop.f32.mrf.mxu0
    %604 = vdwg.mxu0
    %v606 = vsel %vm130, %v557, 0
    %608 = vmatprep.subr.bf16.mxu0 0
    %609 = vmatpush1.bf16.msra.mxu0 0
    %610 = vmatprep.subr.bf16.mxu0 0
    %611 = vmatpush1.bf16.msra.mxu0 0
    %612 = vmatprep.subr.bf16.mxu0 0
    %613 = vmatpush1.bf16.msra.mxu0 0
    %614 = vmatprep.subr.bf16.mxu0 0
    %615 = vmatpush1.bf16.msra.mxu0 0
    %616 = vmatprep.subr.bf16.mxu0 0
    %617 = vmatpush1.bf16.msra.mxu0 0
    %618 = vmatprep.subr.bf16.mxu0 0
    %619 = vmatpush1.bf16.msra.mxu0 0
    %620 = vmatprep.subr.bf16.mxu0 0
    %621 = vmatpush1.bf16.msra.mxu0 0
    %622 = vmatprep.subr.bf16.mxu0 0
    %623 = vmatpush1.bf16.msra.mxu0 %v128
    %624 = vmatprep.subr.bf16.mxu0 0
    %625 = vmatpush2.bf16.msra.mxu0 0
    %626 = vmatprep.subr.bf16.mxu0 0
    %627 = vmatpush2.bf16.msra.mxu0 0
    %628 = vmatprep.subr.bf16.mxu0 0
    %629 = vmatpush2.bf16.msra.mxu0 0
    %630 = vmatprep.subr.bf16.mxu0 0
    %631 = vmatpush2.bf16.msra.mxu0 0
    %632 = vmatprep.subr.bf16.mxu0 0
    %633 = vmatpush2.bf16.msra.mxu0 0
    %634 = vmatprep.subr.bf16.mxu0 0
    %635 = vmatpush2.bf16.msra.mxu0 0
    %636 = vmatprep.subr.bf16.mxu0 0
    %637 = vmatpush2.bf16.msra.mxu0 0
    %638 = vmatprep.subr.bf16.mxu0 0
    %639 = vmatpush2.bf16.msra.mxu0 0
    %640 = vmatprep.mubr.bf16.mxu0 0
    %641 = vmatmul.mubr.bf16.gmra.mxu0 %v606
    %v642 = vpop.f32.mrf.mxu0
    %v643 = vadd.f32 %v600, %v642
    %v644 = vpop.f32.mrf.mxu0
    %v645 = vpop.f32.mrf.mxu0
    %v646 = vpop.f32.mrf.mxu0
    %647 = vdwg.mxu0
    %v648 = vadd.f32 %v643, %v178
    %v649 = vxor.u32 %v648, 2147483648
    %v650 = vmul.f32 %v649, 1.442695
    %v651 = vpow.pop %v650
    %v652 = vadd.f32 %v651, 1.0
    %v653 = vrcp.pop %v652
    %v654 = vmul.f32 1.0, %v653
    %v655 = vtanh.pop %v648
    %v656 = vmul.f32 %v654, %v549
    %658 = vrot.lane.b32.xlu0 %v655, 32
    %v659 = vpop.permute.xlu0 %658
    %v661 = vmul.f32 %v654, %v659
    %663 = vrot.lane.b32.xlu0 %v661, 32
    %v664 = vpop.permute.xlu0 %663
    %v666 = vadd.f32 %v656, %v664
    %v667 = vtanh.pop %v666
    %669 = vrot.lane.b32.xlu0 %v667, 32
    %v670 = vpop.permute.xlu0 %669
    %v672 = vmul.f32 %v654, %v670
    %s673 = scalar_lea.vmem [#allocation2], 20
    %v674 = vld [vmem:[%s673] sm:$0xf]
    %v675 = vpack.c.bf16 %v672, %v672
    %677 = vrot.lane.b32.xlu0 %v675, 64
    %v678 = vpop.permute.xlu0 %677
    %v680 = vsel %vm80, %v678, 0
    %682 = vmatprep.subr.bf16.mxu0 0
    %683 = vmatpush1.bf16.msra.mxu0 0
    %684 = vmatprep.subr.bf16.mxu0 0
    %685 = vmatpush1.bf16.msra.mxu0 0
    %686 = vmatprep.subr.bf16.mxu0 0
    %687 = vmatpush1.bf16.msra.mxu0 0
    %688 = vmatprep.subr.bf16.mxu0 0
    %689 = vmatpush1.bf16.msra.mxu0 0
    %690 = vmatprep.subr.bf16.mxu0 0
    %691 = vmatpush1.bf16.msra.mxu0 0
    %692 = vmatprep.subr.bf16.mxu0 0
    %693 = vmatpush1.bf16.msra.mxu0 0
    %694 = vmatprep.subr.bf16.mxu0 0
    %695 = vmatpush1.bf16.msra.mxu0 %v77
    %696 = vmatprep.subr.bf16.mxu0 0
    %697 = vmatpush1.bf16.msra.mxu0 %v76
    %698 = vmatprep.subr.bf16.mxu0 0
    %699 = vmatpush2.bf16.msra.mxu0 0
    %700 = vmatprep.subr.bf16.mxu0 0
    %701 = vmatpush2.bf16.msra.mxu0 0
    %702 = vmatprep.subr.bf16.mxu0 0
    %703 = vmatpush2.bf16.msra.mxu0 0
    %704 = vmatprep.subr.bf16.mxu0 0
    %705 = vmatpush2.bf16.msra.mxu0 0
    %706 = vmatprep.subr.bf16.mxu0 0
    %707 = vmatpush2.bf16.msra.mxu0 0
    %708 = vmatprep.subr.bf16.mxu0 0
    %709 = vmatpush2.bf16.msra.mxu0 0
    %710 = vmatprep.subr.bf16.mxu0 0
    %711 = vmatpush2.bf16.msra.mxu0 0
    %712 = vmatprep.subr.bf16.mxu0 0
    %713 = vmatpush2.bf16.msra.mxu0 0
    %714 = vmatprep.mubr.bf16.mxu0 0
    %715 = vmatmul.mubr.bf16.gmra.mxu0 %v680
    %v716 = vpop.f32.mrf.mxu0
    %v717 = vadd.f32 0.0, %v716
    %v718 = vpop.f32.mrf.mxu0
    %v719 = vpop.f32.mrf.mxu0
    %v720 = vpop.f32.mrf.mxu0
    %721 = vdwg.mxu0
    %v723 = vsel %vm130, %v674, 0
    %725 = vmatprep.subr.bf16.mxu0 0
    %726 = vmatpush1.bf16.msra.mxu0 0
    %727 = vmatprep.subr.bf16.mxu0 0
    %728 = vmatpush1.bf16.msra.mxu0 0
    %729 = vmatprep.subr.bf16.mxu0 0
    %730 = vmatpush1.bf16.msra.mxu0 0
    %731 = vmatprep.subr.bf16.mxu0 0
    %732 = vmatpush1.bf16.msra.mxu0 0
    %733 = vmatprep.subr.bf16.mxu0 0
    %734 = vmatpush1.bf16.msra.mxu0 0
    %735 = vmatprep.subr.bf16.mxu0 0
    %736 = vmatpush1.bf16.msra.mxu0 0
    %737 = vmatprep.subr.bf16.mxu0 0
    %738 = vmatpush1.bf16.msra.mxu0 0
    %739 = vmatprep.subr.bf16.mxu0 0
    %740 = vmatpush1.bf16.msra.mxu0 %v128
    %741 = vmatprep.subr.bf16.mxu0 0
    %742 = vmatpush2.bf16.msra.mxu0 0
    %743 = vmatprep.subr.bf16.mxu0 0
    %744 = vmatpush2.bf16.msra.mxu0 0
    %745 = vmatprep.subr.bf16.mxu0 0
    %746 = vmatpush2.bf16.msra.mxu0 0
    %747 = vmatprep.subr.bf16.mxu0 0
    %748 = vmatpush2.bf16.msra.mxu0 0
    %749 = vmatprep.subr.bf16.mxu0 0
    %750 = vmatpush2.bf16.msra.mxu0 0
    %751 = vmatprep.subr.bf16.mxu0 0
    %752 = vmatpush2.bf16.msra.mxu0 0
    %753 = vmatprep.subr.bf16.mxu0 0
    %754 = vmatpush2.bf16.msra.mxu0 0
    %755 = vmatprep.subr.bf16.mxu0 0
    %756 = vmatpush2.bf16.msra.mxu0 0
    %757 = vmatprep.mubr.bf16.mxu0 0
    %758 = vmatmul.mubr.bf16.gmra.mxu0 %v723
    %v759 = vpop.f32.mrf.mxu0
    %v760 = vadd.f32 %v717, %v759
    %v761 = vpop.f32.mrf.mxu0
    %v762 = vpop.f32.mrf.mxu0
    %v763 = vpop.f32.mrf.mxu0
    %764 = vdwg.mxu0
    %v765 = vadd.f32 %v760, %v178
    %v766 = vxor.u32 %v765, 2147483648
    %v767 = vmul.f32 %v766, 1.442695
    %v768 = vpow.pop %v767
    %v769 = vadd.f32 %v768, 1.0
    %v770 = vrcp.pop %v769
    %v771 = vmul.f32 1.0, %v770
    %v772 = vtanh.pop %v765
    %v773 = vmul.f32 %v771, %v666
    %775 = vrot.lane.b32.xlu0 %v772, 32
    %v776 = vpop.permute.xlu0 %775
    %v778 = vmul.f32 %v771, %v776
    %780 = vrot.lane.b32.xlu0 %v778, 32
    %v781 = vpop.permute.xlu0 %780
    %v783 = vadd.f32 %v773, %v781
    %v784 = vtanh.pop %v783
    %786 = vrot.lane.b32.xlu0 %v784, 32
    %v787 = vpop.permute.xlu0 %786
    %v789 = vmul.f32 %v771, %v787
    %s790 = scalar_lea.vmem [#allocation2], 24
    %v791 = vld [vmem:[%s790] sm:$0xf]
    %v792 = vpack.c.bf16 %v789, %v789
    %794 = vrot.lane.b32.xlu0 %v792, 64
    %v795 = vpop.permute.xlu0 %794
    %v797 = vsel %vm80, %v795, 0
    %799 = vmatprep.subr.bf16.mxu0 0
    %800 = vmatpush1.bf16.msra.mxu0 0
    %801 = vmatprep.subr.bf16.mxu0 0
    %802 = vmatpush1.bf16.msra.mxu0 0
    %803 = vmatprep.subr.bf16.mxu0 0
    %804 = vmatpush1.bf16.msra.mxu0 0
    %805 = vmatprep.subr.bf16.mxu0 0
    %806 = vmatpush1.bf16.msra.mxu0 0
    %807 = vmatprep.subr.bf16.mxu0 0
    %808 = vmatpush1.bf16.msra.mxu0 0
    %809 = vmatprep.subr.bf16.mxu0 0
    %810 = vmatpush1.bf16.msra.mxu0 0
    %811 = vmatprep.subr.bf16.mxu0 0
    %812 = vmatpush1.bf16.msra.mxu0 %v77
    %813 = vmatprep.subr.bf16.mxu0 0
    %814 = vmatpush1.bf16.msra.mxu0 %v76
    %815 = vmatprep.subr.bf16.mxu0 0
    %816 = vmatpush2.bf16.msra.mxu0 0
    %817 = vmatprep.subr.bf16.mxu0 0
    %818 = vmatpush2.bf16.msra.mxu0 0
    %819 = vmatprep.subr.bf16.mxu0 0
    %820 = vmatpush2.bf16.msra.mxu0 0
    %821 = vmatprep.subr.bf16.mxu0 0
    %822 = vmatpush2.bf16.msra.mxu0 0
    %823 = vmatprep.subr.bf16.mxu0 0
    %824 = vmatpush2.bf16.msra.mxu0 0
    %825 = vmatprep.subr.bf16.mxu0 0
    %826 = vmatpush2.bf16.msra.mxu0 0
    %827 = vmatprep.subr.bf16.mxu0 0
    %828 = vmatpush2.bf16.msra.mxu0 0
    %829 = vmatprep.subr.bf16.mxu0 0
    %830 = vmatpush2.bf16.msra.mxu0 0
    %831 = vmatprep.mubr.bf16.mxu0 0
    %832 = vmatmul.mubr.bf16.gmra.mxu0 %v797
    %v833 = vpop.f32.mrf.mxu0
    %v834 = vadd.f32 0.0, %v833
    %v835 = vpop.f32.mrf.mxu0
    %v836 = vpop.f32.mrf.mxu0
    %v837 = vpop.f32.mrf.mxu0
    %838 = vdwg.mxu0
    %v840 = vsel %vm130, %v791, 0
    %842 = vmatprep.subr.bf16.mxu0 0
    %843 = vmatpush1.bf16.msra.mxu0 0
    %844 = vmatprep.subr.bf16.mxu0 0
    %845 = vmatpush1.bf16.msra.mxu0 0
    %846 = vmatprep.subr.bf16.mxu0 0
    %847 = vmatpush1.bf16.msra.mxu0 0
    %848 = vmatprep.subr.bf16.mxu0 0
    %849 = vmatpush1.bf16.msra.mxu0 0
    %850 = vmatprep.subr.bf16.mxu0 0
    %851 = vmatpush1.bf16.msra.mxu0 0
    %852 = vmatprep.subr.bf16.mxu0 0
    %853 = vmatpush1.bf16.msra.mxu0 0
    %854 = vmatprep.subr.bf16.mxu0 0
    %855 = vmatpush1.bf16.msra.mxu0 0
    %856 = vmatprep.subr.bf16.mxu0 0
    %857 = vmatpush1.bf16.msra.mxu0 %v128
    %858 = vmatprep.subr.bf16.mxu0 0
    %859 = vmatpush2.bf16.msra.mxu0 0
    %860 = vmatprep.subr.bf16.mxu0 0
    %861 = vmatpush2.bf16.msra.mxu0 0
    %862 = vmatprep.subr.bf16.mxu0 0
    %863 = vmatpush2.bf16.msra.mxu0 0
    %864 = vmatprep.subr.bf16.mxu0 0
    %865 = vmatpush2.bf16.msra.mxu0 0
    %866 = vmatprep.subr.bf16.mxu0 0
    %867 = vmatpush2.bf16.msra.mxu0 0
    %868 = vmatprep.subr.bf16.mxu0 0
    %869 = vmatpush2.bf16.msra.mxu0 0
    %870 = vmatprep.subr.bf16.mxu0 0
    %871 = vmatpush2.bf16.msra.mxu0 0
    %872 = vmatprep.subr.bf16.mxu0 0
    %873 = vmatpush2.bf16.msra.mxu0 0
    %874 = vmatprep.mubr.bf16.mxu0 0
    %875 = vmatmul.mubr.bf16.gmra.mxu0 %v840
    %v876 = vpop.f32.mrf.mxu0
    %v877 = vadd.f32 %v834, %v876
    %v878 = vpop.f32.mrf.mxu0
    %v879 = vpop.f32.mrf.mxu0
    %v880 = vpop.f32.mrf.mxu0
    %881 = vdwg.mxu0
    %v882 = vadd.f32 %v877, %v178
    %v883 = vxor.u32 %v882, 2147483648
    %v884 = vmul.f32 %v883, 1.442695
    %v885 = vpow.pop %v884
    %v886 = vadd.f32 %v885, 1.0
    %v887 = vrcp.pop %v886
    %v888 = vmul.f32 1.0, %v887
    %v889 = vtanh.pop %v882
    %v890 = vmul.f32 %v888, %v783
    %892 = vrot.lane.b32.xlu0 %v889, 32
    %v893 = vpop.permute.xlu0 %892
    %v895 = vmul.f32 %v888, %v893
    %897 = vrot.lane.b32.xlu0 %v895, 32
    %v898 = vpop.permute.xlu0 %897
    %v900 = vadd.f32 %v890, %v898
    %v901 = vtanh.pop %v900
    %903 = vrot.lane.b32.xlu0 %v901, 32
    %v904 = vpop.permute.xlu0 %903
    %v906 = vmul.f32 %v888, %v904
    %s907 = scalar_lea.vmem [#allocation2], 28
    %v908 = vld [vmem:[%s907] sm:$0xf]
    %v909 = vpack.c.bf16 %v906, %v906
    %911 = vrot.lane.b32.xlu0 %v909, 64
    %v912 = vpop.permute.xlu0 %911
    %v914 = vsel %vm80, %v912, 0
    %916 = vmatprep.subr.bf16.mxu0 0
    %917 = vmatpush1.bf16.msra.mxu0 0
    %918 = vmatprep.subr.bf16.mxu0 0
    %919 = vmatpush1.bf16.msra.mxu0 0
    %920 = vmatprep.subr.bf16.mxu0 0
    %921 = vmatpush1.bf16.msra.mxu0 0
    %922 = vmatprep.subr.bf16.mxu0 0
    %923 = vmatpush1.bf16.msra.mxu0 0
    %924 = vmatprep.subr.bf16.mxu0 0
    %925 = vmatpush1.bf16.msra.mxu0 0
    %926 = vmatprep.subr.bf16.mxu0 0
    %927 = vmatpush1.bf16.msra.mxu0 0
    %928 = vmatprep.subr.bf16.mxu0 0
    %929 = vmatpush1.bf16.msra.mxu0 %v77
    %930 = vmatprep.subr.bf16.mxu0 0
    %931 = vmatpush1.bf16.msra.mxu0 %v76
    %932 = vmatprep.subr.bf16.mxu0 0
    %933 = vmatpush2.bf16.msra.mxu0 0
    %934 = vmatprep.subr.bf16.mxu0 0
    %935 = vmatpush2.bf16.msra.mxu0 0
    %936 = vmatprep.subr.bf16.mxu0 0
    %937 = vmatpush2.bf16.msra.mxu0 0
    %938 = vmatprep.subr.bf16.mxu0 0
    %939 = vmatpush2.bf16.msra.mxu0 0
    %940 = vmatprep.subr.bf16.mxu0 0
    %941 = vmatpush2.bf16.msra.mxu0 0
    %942 = vmatprep.subr.bf16.mxu0 0
    %943 = vmatpush2.bf16.msra.mxu0 0
    %944 = vmatprep.subr.bf16.mxu0 0
    %945 = vmatpush2.bf16.msra.mxu0 0
    %946 = vmatprep.subr.bf16.mxu0 0
    %947 = vmatpush2.bf16.msra.mxu0 0
    %948 = vmatprep.mubr.bf16.mxu0 0
    %949 = vmatmul.mubr.bf16.gmra.mxu0 %v914
    %v950 = vpop.f32.mrf.mxu0
    %v951 = vadd.f32 0.0, %v950
    %v952 = vpop.f32.mrf.mxu0
    %v953 = vpop.f32.mrf.mxu0
    %v954 = vpop.f32.mrf.mxu0
    %955 = vdwg.mxu0
    %v957 = vsel %vm130, %v908, 0
    %959 = vmatprep.subr.bf16.mxu0 0
    %960 = vmatpush1.bf16.msra.mxu0 0
    %961 = vmatprep.subr.bf16.mxu0 0
    %962 = vmatpush1.bf16.msra.mxu0 0
    %963 = vmatprep.subr.bf16.mxu0 0
    %964 = vmatpush1.bf16.msra.mxu0 0
    %965 = vmatprep.subr.bf16.mxu0 0
    %966 = vmatpush1.bf16.msra.mxu0 0
    %967 = vmatprep.subr.bf16.mxu0 0
    %968 = vmatpush1.bf16.msra.mxu0 0
    %969 = vmatprep.subr.bf16.mxu0 0
    %970 = vmatpush1.bf16.msra.mxu0 0
    %971 = vmatprep.subr.bf16.mxu0 0
    %972 = vmatpush1.bf16.msra.mxu0 0
    %973 = vmatprep.subr.bf16.mxu0 0
    %974 = vmatpush1.bf16.msra.mxu0 %v128
    %975 = vmatprep.subr.bf16.mxu0 0
    %976 = vmatpush2.bf16.msra.mxu0 0
    %977 = vmatprep.subr.bf16.mxu0 0
    %978 = vmatpush2.bf16.msra.mxu0 0
    %979 = vmatprep.subr.bf16.mxu0 0
    %980 = vmatpush2.bf16.msra.mxu0 0
    %981 = vmatprep.subr.bf16.mxu0 0
    %982 = vmatpush2.bf16.msra.mxu0 0
    %983 = vmatprep.subr.bf16.mxu0 0
    %984 = vmatpush2.bf16.msra.mxu0 0
    %985 = vmatprep.subr.bf16.mxu0 0
    %986 = vmatpush2.bf16.msra.mxu0 0
    %987 = vmatprep.subr.bf16.mxu0 0
    %988 = vmatpush2.bf16.msra.mxu0 0
    %989 = vmatprep.subr.bf16.mxu0 0
    %990 = vmatpush2.bf16.msra.mxu0 0
    %991 = vmatprep.mubr.bf16.mxu0 0
    %992 = vmatmul.mubr.bf16.gmra.mxu0 %v957
    %v993 = vpop.f32.mrf.mxu0
    %v994 = vadd.f32 %v951, %v993
    %v995 = vpop.f32.mrf.mxu0
    %v996 = vpop.f32.mrf.mxu0
    %v997 = vpop.f32.mrf.mxu0
    %998 = vdwg.mxu0
    %v999 = vadd.f32 %v994, %v178
    %v1000 = vxor.u32 %v999, 2147483648
    %v1001 = vmul.f32 %v1000, 1.442695
    %v1002 = vpow.pop %v1001
    %v1003 = vadd.f32 %v1002, 1.0
    %v1004 = vrcp.pop %v1003
    %v1005 = vmul.f32 1.0, %v1004
    %v1006 = vtanh.pop %v999
    %v1007 = vmul.f32 %v1005, %v900
    %1009 = vrot.lane.b32.xlu0 %v1006, 32
    %v1010 = vpop.permute.xlu0 %1009
    %v1012 = vmul.f32 %v1005, %v1010
    %1014 = vrot.lane.b32.xlu0 %v1012, 32
    %v1015 = vpop.permute.xlu0 %1014
    %v1017 = vadd.f32 %v1007, %v1015
    %v1018 = vtanh.pop %v1017
    %1020 = vrot.lane.b32.xlu0 %v1018, 32
    %v1021 = vpop.permute.xlu0 %1020
    %v1023 = vmul.f32 %v1005, %v1021
    %1025 = vrot.lane.b32.xlu0 %v1023, 64
    %v1026 = vpop.permute.xlu0 %1025
    %1028 = vst.msk [vmem:[#allocation8] sm:$0xff] %vm80, %v1026
    // Predicated region
    $region30: #{tpu_custom_call.1} parent=1 // pred_check
      _
    $region31: #{tpu_custom_call.1} parent=1 // pred_check_branch
      %1030 = sbr.rel (0) target = $region33
    $region32: #{tpu_custom_call.1} parent=1 // pred_region
      %s1032 = ssub.s32 128, 128
      %1033 = vsyncadd [#allocation4], %s1032
      %s1035 = sshll.u32 [#allocation8], 4
      %s1036 = int_to_ptr.vmem [resolvable:$true] %s1035
      %1038 = dma.vmem_to_hbm [thread:$0]  %s1036, 128, %s4, [#allocation4]
    $region33: #{tpu_custom_call.1} parent=1 // pred_fallthru
      _
    // Predicated region
    $region34: #{tpu_custom_call.1} parent=1 // pred_check
      _
    $region35: #{tpu_custom_call.1} parent=1 // pred_check_branch
      %1040 = sbr.rel (0) target = $region37
    $region36: #{tpu_custom_call.1} parent=1 // pred_region
      %1041 = dma.done [#allocation4], 128
    $region37: #{tpu_custom_call.1} parent=1 // pred_fallthru
      _
    %1042 = vsyncpa [#allocation3], 1
    %1043 = vsyncpa [#allocation6], 1
    %1044 = vsyncpa [#allocation4], 1

</llo_original>
